<compile_context>
chip_gen: v6e
topology: v6e:2x2x1
jax: 0.10.0
libtpu: 0.0.40
codegen_flags: <defaults>
</compile_context>

<pallas_src>
import math

import jax
import jax.numpy as jnp
from jax.experimental import pallas as pl
from jax.experimental.pallas import tpu as pltpu


# ---------------------------------------------------------------------------
# Kernel: one (batch-tile x out-tile) block of one group, reduced over k.
# ---------------------------------------------------------------------------
def _block_linear_kernel(x_ref, w_ref, b_ref, o_ref, acc_ref):
    # x_ref: [tm, tk], w_ref: [tk, tn] (pre-transposed), b_ref: [1, tn].
    k = pl.program_id(3)

    @pl.when(k == 0)
    def _():
        acc_ref[...] = jnp.zeros_like(acc_ref)

    acc_ref[...] += jnp.dot(x_ref[...], w_ref[...],
                            preferred_element_type=jnp.float32)

    @pl.when(k == pl.num_programs(3) - 1)
    def _():
        o_ref[...] = (acc_ref[...] + b_ref[...].astype(jnp.float32)
                      ).astype(o_ref.dtype)


# ---------------------------------------------------------------------------
# Static helpers (tile / grouping / VMEM-budget selection).
# ---------------------------------------------------------------------------
def _round_up(n, m):
    return ((n + m - 1) // m) * m


def _vmem_budget_bytes():
    """Generation-aware VMEM budget (v7x: 64 MiB part, v5e/v6e: 128 MiB)."""
    cap = 64 * 1024 * 1024
    try:
        info = pltpu.get_tpu_info()
        cap = int(getattr(info, "vmem_capacity_bytes", cap) or cap)
    except Exception:
        pass
    return int(min(96 * 1024 * 1024, max(32 * 1024 * 1024, cap * 3 // 4)))


def _choose_group_size(block_num, Hb, Ob):
    """Smallest group of consecutive blocks whose grouped widths are 128-lane
    aligned; fall back to one dense group (full pre-masked matmul)."""
    for g in range(1, block_num + 1):
        if block_num % g == 0 and (g * Hb) % 128 == 0 and (g * Ob) % 128 == 0:
            return g
    return block_num


def _pick_tiles(B, Hg, Og, vmem_budget):
    """Return (tm, tk, tn, B_pad): batch / reduction / lane tiles + padded B."""
    # Lane tile: keep the whole per-group output width resident when modest
    # (the weight block is then DMA'd once per group, not per batch tile).
    if Og <= 512:
        tn = Og          # 128-aligned when grouped; full extent when dense
    else:
        tn = next((c for c in (512, 256, 128) if Og % c == 0), Og)

    # Reduction tile: whole per-group hidden in one K step when modest.
    if Hg <= 2048:
        tk = Hg
    else:
        tk = next((c for c in (2048, 1024, 512, 256) if Hg % c == 0), Hg)

    target = max(2 * 1024 * 1024, int(vmem_budget * 0.55))

    def working_set(tm):
        # Double-buffered x / w / out tiles (f32-sized, conservative) + f32 acc.
        return (2 * (tm * tk + tk * tn + tm * tn) + tm * tn + 2 * tn) * 4

    # If even the smallest batch tile blows the budget, shrink the K tile
    # first (never the lane tile -> stores stay lane-dense).
    while working_set(8) > target and tk % 256 == 0 and Hg % (tk // 2) == 0:
        tk //= 2

    # Batch tile: largest multiple-of-8 candidate that fits the budget while
    # keeping zero-padding of the batch small.
    bp8 = _round_up(max(B, 1), 8)
    best = None
    for cand in (1024, 512, 256, 128, 64, 32, 16, 8):
        if cand > bp8 or working_set(cand) > target:
            continue
        padded = _round_up(max(B, 1), cand)
        key = (padded, -cand)
        if best is None or key < best[0]:
            best = (key, cand, padded)
    if best is None:
        tm, b_pad = 8, bp8
    else:
        tm, b_pad = best[1], best[2]
    return tm, tk, tn, b_pad


# ---------------------------------------------------------------------------
# One-time parameter packing (module init) + forward apply.
# ---------------------------------------------------------------------------
def prepare_masked_block_linear(weight, bias, block_num):
    """One-time packing of the block-diagonal weight (call at init, not per
    forward).  Returns (params, config): params holds arrays only, config
    holds static Python ints."""
    O, H = weight.shape
    assert H % block_num == 0 and O % block_num == 0
    Hb, Ob = H // block_num, O // block_num

    G = _choose_group_size(block_num, Hb, Ob)
    ng = block_num // G
    Hg, Og = G * Hb, G * Ob

    # Apply the block-diagonal mask ONCE here, then keep only the ng diagonal
    # group-blocks, pre-transposed to [ng, Hg, Og] so the kernel contracts
    # x's last dim directly on the MXU (no in-kernel transpose, no mask
    # stream, off-group weights never read at run time).
    rows = jnp.arange(O)[:, None] // Ob
    cols = jnp.arange(H)[None, :] // Hb
    mask = (rows == cols).astype(weight.dtype)
    wm = weight * mask

    idx = jnp.arange(ng)
    w_groups = wm.reshape(ng, Og, ng, Hg)[idx, :, idx, :]   # [ng, Og, Hg]
    w_groups = jnp.swapaxes(w_groups, 1, 2)                 # [ng, Hg, Og]
    b_groups = bias.reshape(ng, 1, Og)

    params = {"w": w_groups, "b": b_groups}
    config = {"H": H, "O": O, "ng": ng, "Hg": Hg, "Og": Og}
    return params, config


def masked_block_linear(x, params, config):
    """y = x @ (W * blockdiag_mask)^T + b using the prepared group blocks."""
    H, O = config["H"], config["O"]
    ng, Hg, Og = config["ng"], config["Hg"], config["Og"]

    *lead, h_in = x.shape
    assert h_in == H
    B = int(math.prod(lead)) if lead else 1
    x2 = x.reshape(B, H)

    vmem_budget = _vmem_budget_bytes()
    tm, tk, tn, b_pad = _pick_tiles(B, Hg, Og, vmem_budget)
    if b_pad != B:
        x2 = jnp.pad(x2, ((0, b_pad - B), (0, 0)))

    nkb = Hg // tk      # K blocks per group
    njb = Og // tn      # lane blocks per group
    grid = (ng, njb, b_pad // tm, nkb)   # batch innermost of the parallel axes

    out = pl.pallas_call(
        _block_linear_kernel,
        out_shape=jax.ShapeDtypeStruct((b_pad, O), x.dtype),
        grid_spec=pltpu.PrefetchScalarGridSpec(
            num_scalar_prefetch=0,
            grid=grid,
            in_specs=[
                # x tile: the k-th hidden chunk of group g, selected purely
                # via the index map (no wrapper-side re-layout of x).
                pl.BlockSpec((tm, tk), lambda g, j, i, k: (i, g * nkb + k)),
                # Weight tile: index independent of the batch axis i, so it is
                # not re-streamed per batch tile.
                pl.BlockSpec((None, tk, tn), lambda g, j, i, k: (g, k, j)),
                # Bias tile: likewise independent of i and k.
                pl.BlockSpec((None, 1, tn), lambda g, j, i, k: (g, 0, j)),
            ],
            # Output written straight into the [B, O] layout (lane-dense).
            out_specs=pl.BlockSpec((tm, tn),
                                   lambda g, j, i, k: (i, g * njb + j)),
            scratch_shapes=[pltpu.VMEM((tm, tn), jnp.float32)],
        ),
        compiler_params=pltpu.CompilerParams(
            dimension_semantics=("parallel", "parallel", "parallel",
                                 "arbitrary"),
            vmem_limit_bytes=vmem_budget,
        ),
    )(x2, params["w"], params["b"])

    y = out[:B] if b_pad != B else out
    return y.reshape(*lead, O) if lead else y.reshape(O)


if __name__ == "__main__":
    hidden_dim = 32
    output_dim = 64
    block_num = 4
    batch = 8

    key = jax.random.PRNGKey(0)
    kx, kw, kn = jax.random.split(key, 3)

    x = jax.random.normal(kx, (batch, hidden_dim), jnp.float32)

    # reset_parameters(): kaiming_uniform_(a=sqrt(5)) -> U(-1/sqrt(fan_in), .),
    # zero bias (exact init values are irrelevant for the kernel check).
    bound = 1.0 / math.sqrt(hidden_dim)
    weight = jax.random.uniform(
        kw, (output_dim, hidden_dim), jnp.float32, minval=-bound, maxval=bound)
    bias = jnp.zeros((output_dim,), jnp.float32)

    # Inject off-block noise to verify the masked (block-diagonal) semantics:
    # the kernel must behave as if those entries were zero.
    hb, ob = hidden_dim // block_num, output_dim // block_num
    rows = jnp.arange(output_dim)[:, None] // ob
    cols = jnp.arange(hidden_dim)[None, :] // hb
    mask = (rows == cols).astype(jnp.float32)
    weight_noisy = weight + (1.0 - mask) * jax.random.normal(kn, weight.shape)

    # Prepare once (module init); forward never re-gathers / re-masks.
    params, config = prepare_masked_block_linear(weight_noisy, bias, block_num)

    y = masked_block_linear(x, params, config)
    y = jax.block_until_ready(y)

    # Pure-JAX reference: F.linear(x, W * mask, b).
    y_ref = x @ (weight_noisy * mask).T + bias
    assert y.shape == (batch, output_dim)
    assert jnp.allclose(y, y_ref, atol=1e-5, rtol=1e-5), "mismatch vs reference"

    print("KERNEL_OK")
</pallas_src>

<mosaic_0001>
module attributes {stable_mosaic.version = 11 : i64} {
  func.func @_block_linear_kernel(%arg0: i32, %arg1: i32, %arg2: i32, %arg3: i32, %arg4: memref<8x32xf32, #tpu.memory_space<vmem>>, %arg5: memref<1x32x64xf32, #tpu.memory_space<vmem>>, %arg6: memref<1x1x64xf32, #tpu.memory_space<vmem>>, %arg7: memref<8x64xf32, #tpu.memory_space<vmem>>, %arg8: memref<8x64xf32, #tpu.memory_space<vmem>>) attributes {dimension_semantics = [#tpu.dimension_semantics<parallel>, #tpu.dimension_semantics<parallel>, #tpu.dimension_semantics<parallel>, #tpu.dimension_semantics<arbitrary>], iteration_bounds = array<i64: 1, 1, 1, 1>, scalar_prefetch = 0 : i64, scratch_operands = 1 : i64, tpu.core_type = #tpu.core_type<tc>, window_params = [{transform_indices = @transform_0, window_bounds = array<i64: 8, 32>}, {transform_indices = @transform_1, window_bounds = array<i64: 1, 32, 64>}, {transform_indices = @transform_2, window_bounds = array<i64: 1, 1, 64>}, {transform_indices = @transform_3, window_bounds = array<i64: 8, 64>}]} {
    %c0_i32 = arith.constant 0 : i32
    %0 = arith.cmpi eq, %arg3, %c0_i32 : i32
    %1 = arith.extui %0 : i1 to i32
    %c0_i32_0 = arith.constant 0 : i32
    %2 = arith.cmpi ne, %1, %c0_i32_0 : i32
    scf.if %2 {
      %cst_11 = arith.constant 0.000000e+00 : f32
      %13 = vector.broadcast %cst_11 : f32 to vector<8x64xf32>
      %c0_12 = arith.constant 0 : index
      %c0_13 = arith.constant 0 : index
      %14 = vector.load %arg8[%c0_12, %c0_13] : memref<8x64xf32, #tpu.memory_space<vmem>>, vector<8x64xf32>
      tpu.vector_store %arg8[%c0_12, %c0_13], %13 {strides = array<i32>} : memref<8x64xf32, #tpu.memory_space<vmem>>, vector<8x64xf32>,
    } else {
    }
    %c0 = arith.constant 0 : index
    %c0_1 = arith.constant 0 : index
    %3 = vector.load %arg8[%c0, %c0_1] : memref<8x64xf32, #tpu.memory_space<vmem>>, vector<8x64xf32>
    %c0_2 = arith.constant 0 : index
    %c0_3 = arith.constant 0 : index
    %4 = vector.load %arg4[%c0_2, %c0_3] : memref<8x32xf32, #tpu.memory_space<vmem>>, vector<8x32xf32>
    %c0_4 = arith.constant 0 : index
    %c0_5 = arith.constant 0 : index
    %c0_6 = arith.constant 0 : index
    %5 = vector.load %arg5[%c0_4, %c0_5, %c0_6] : memref<1x32x64xf32, #tpu.memory_space<vmem>>, vector<1x32x64xf32>
    %6 = vector.shape_cast %5 : vector<1x32x64xf32> to vector<32x64xf32>
    %cst = arith.constant dense<0.000000e+00> : vector<8x64xf32>
    %7 = tpu.matmul %4, %6, %cst {dimension_numbers = #tpu.dot_dimension_numbers<[1], [0], [0], [1], [0, 0, 1, 1], [], []>} : vector<8x32xf32>, vector<32x64xf32>, vector<8x64xf32> -> vector<8x64xf32>
    %8 = arith.addf %3, %7 : vector<8x64xf32>
    %c0_7 = arith.constant 0 : index
    %c0_8 = arith.constant 0 : index
    %9 = vector.load %arg8[%c0_7, %c0_8] : memref<8x64xf32, #tpu.memory_space<vmem>>, vector<8x64xf32>
    tpu.vector_store %arg8[%c0_7, %c0_8], %8 {strides = array<i32>} : memref<8x64xf32, #tpu.memory_space<vmem>>, vector<8x64xf32>,
    %c0_i32_9 = arith.constant 0 : i32
    %10 = arith.cmpi eq, %arg3, %c0_i32_9 : i32
    %11 = arith.extui %10 : i1 to i32
    %c0_i32_10 = arith.constant 0 : i32
    %12 = arith.cmpi ne, %11, %c0_i32_10 : i32
    scf.if %12 {
      %c0_11 = arith.constant 0 : index
      %c0_12 = arith.constant 0 : index
      %13 = vector.load %arg8[%c0_11, %c0_12] : memref<8x64xf32, #tpu.memory_space<vmem>>, vector<8x64xf32>
      %c0_13 = arith.constant 0 : index
      %c0_14 = arith.constant 0 : index
      %c0_15 = arith.constant 0 : index
      %14 = vector.load %arg6[%c0_13, %c0_14, %c0_15] : memref<1x1x64xf32, #tpu.memory_space<vmem>>, vector<1x1x64xf32>
      %15 = vector.shape_cast %14 : vector<1x1x64xf32> to vector<1x64xf32>
      %16 = vector.broadcast %15 : vector<1x64xf32> to vector<8x64xf32>
      %17 = arith.addf %13, %16 : vector<8x64xf32>
      %c0_16 = arith.constant 0 : index
      %c0_17 = arith.constant 0 : index
      %18 = vector.load %arg7[%c0_16, %c0_17] : memref<8x64xf32, #tpu.memory_space<vmem>>, vector<8x64xf32>
      tpu.vector_store %arg7[%c0_16, %c0_17], %17 {strides = array<i32>} : memref<8x64xf32, #tpu.memory_space<vmem>>, vector<8x64xf32>,
    } else {
    }
    return
  }
  func.func @transform_0(%arg0: i32, %arg1: i32, %arg2: i32, %arg3: i32) -> (i32, i32) {
    %c1_i32 = arith.constant 1 : i32
    %0 = arith.muli %arg0, %c1_i32 : i32
    %1 = arith.addi %0, %arg3 : i32
    %c0_i32 = arith.constant 0 : i32
    return %arg2, %1 : i32, i32
  }
  func.func @transform_1(%arg0: i32, %arg1: i32, %arg2: i32, %arg3: i32) -> (i32, i32, i32) {
    %c0_i32 = arith.constant 0 : i32
    return %arg0, %arg3, %arg1 : i32, i32, i32
  }
  func.func @transform_2(%arg0: i32, %arg1: i32, %arg2: i32, %arg3: i32) -> (i32, i32, i32) {
    %c0_i32 = arith.constant 0 : i32
    %c0_i32_0 = arith.constant 0 : i32
    return %arg0, %c0_i32, %arg1 : i32, i32, i32
  }
  func.func @transform_3(%arg0: i32, %arg1: i32, %arg2: i32, %arg3: i32) -> (i32, i32) {
    %c1_i32 = arith.constant 1 : i32
    %0 = arith.muli %arg0, %c1_i32 : i32
    %1 = arith.addi %0, %arg1 : i32
    %c0_i32 = arith.constant 0 : i32
    return %arg2, %1 : i32, i32
  }
}

</mosaic_0001>

<llo_original>
// kernel: tpu_custom_call.1
$region0: #{tpu_custom_call.1}
  #allocation0 [shape = 'u32[]', space=smem, size = 0x4, offset = 0x4, fixed_abs, tag = 'smem constant byte address 0x4 - core index']
  #allocation1 [shape = 'u32[144,128]{1,0:T(1,128)}', space=vmem, size = 0x12000, scoped, tag = 'internal scratch']
  #allocation2 [shape = 'f32[8,64]{1,0:T(8,128)}', space=vmem, size = 0x1000, scoped, tag = 'scratch operand']
  %s0 = inlined_call_operand.hbm [shape: f32[8,32], index: 0, kind: input, shape index: {}]
  %s1 = inlined_call_operand.hbm [shape: f32[1,32,64], index: 1, kind: input, shape index: {}]
  %s2 = inlined_call_operand.vmem [shape: f32[1,1,64], index: 2, kind: input, shape index: {}]
  %s3 = inlined_call_operand.hbm [shape: f32[8,64], index: 3, kind: output, shape index: {}]
  %s4 = sld [smem:[#allocation0]]
  $region38: #{tpu_custom_call.1} parent=0
    _
  %s6 = ssub.s32 1, %s4
  %s7 = scalar_select 0, %s6, %s4
  $region1: #{tpu_custom_call.1} parent=0
    #allocation3 [shape = 'u8[4096]{0}', space=vmem, size = 0x1000, scoped, tag = 'input window, operand 0, single buffered']
    #allocation4 [shape = 's32[1]{0}', space=sflag, size = 0x4, scoped, tag = 'scoped memory for tpu_custom_call.1']
    #allocation5 [shape = 's32[1]{0}', space=sflag, size = 0x4, scoped, tag = 'scoped memory for tpu_custom_call.1']
    #allocation6 [shape = 'u8[16384]{0}', space=vmem, size = 0x4000, scoped, tag = 'input window, operand 1, single buffered']
    #allocation7 [shape = 's32[1]{0}', space=sflag, size = 0x4, scoped, tag = 'scoped memory for tpu_custom_call.1']
    #allocation8 [shape = 'u8[4096]{0}', space=vmem, size = 0x1000, scoped, tag = 'output window, operand 0, single buffered']
    %8 = vsyncpa [#allocation4], 0
    %9 = vsyncpa [#allocation7], 0
    %10 = vsyncpa [#allocation5], 0
    // Predicated region
    $region2: #{tpu_custom_call.1} parent=1 // pred_check
      _
    $region3: #{tpu_custom_call.1} parent=1 // pred_check_branch
      %12 = sbr.rel (0) target = $region5
    $region4: #{tpu_custom_call.1} parent=1 // pred_region
      %s13 = sadd.s32 0, 0
      %s15 = ssub.s32 128, 128
      %16 = vsyncadd [#allocation4], %s15
      %s17 = smul.addr %s13, 128
      %s18 = scalar_lea.hbm %s0, %s17
      %s20 = sshll.u32 [#allocation3], 4
      %s21 = int_to_ptr.vmem [resolvable:$true] %s20
      %23 = dma.hbm_to_vmem [thread:$0]  %s18, 128, %s21, [#allocation4]
    $region5: #{tpu_custom_call.1} parent=1 // pred_fallthru
      _
    // Predicated region
    $region6: #{tpu_custom_call.1} parent=1 // pred_check
      _
    $region7: #{tpu_custom_call.1} parent=1 // pred_check_branch
      %25 = sbr.rel (0) target = $region9
    $region8: #{tpu_custom_call.1} parent=1 // pred_region
      %s27 = ssub.s32 512, 512
      %28 = vsyncadd [#allocation7], %s27
      %s29 = sshll.u32 [#allocation6], 4
      %s30 = int_to_ptr.vmem [resolvable:$true] %s29
      %35 = dma.hbm_to_vmem [thread:$0]  %s1, 512, %s30, [#allocation7], 128, 128, 8
    $region9: #{tpu_custom_call.1} parent=1 // pred_fallthru
      _
    // Predicated region
    $region10: #{tpu_custom_call.1} parent=1 // pred_check
      _
    $region11: #{tpu_custom_call.1} parent=1 // pred_check_branch
      %37 = sbr.rel (0) target = $region13
    $region12: #{tpu_custom_call.1} parent=1 // pred_region
      _
    $region13: #{tpu_custom_call.1} parent=1 // pred_fallthru
      _
    // Predicated region
    $region14: #{tpu_custom_call.1} parent=1 // pred_check
      _
    $region15: #{tpu_custom_call.1} parent=1 // pred_check_branch
      %39 = sbr.rel (0) target = $region17
    $region16: #{tpu_custom_call.1} parent=1 // pred_region
      %40 = dma.done [#allocation4], 128
    $region17: #{tpu_custom_call.1} parent=1 // pred_fallthru
      _
    // Predicated region
    $region18: #{tpu_custom_call.1} parent=1 // pred_check
      _
    $region19: #{tpu_custom_call.1} parent=1 // pred_check_branch
      %42 = sbr.rel (0) target = $region21
    $region20: #{tpu_custom_call.1} parent=1 // pred_region
      %43 = dma.done [#allocation7], 512
    $region21: #{tpu_custom_call.1} parent=1 // pred_fallthru
      _
    %s44 = sadd.s32 0, 0
    %s45 = sadd.s32 0, 0
    %p46 = scmp.eq.s32.totalorder 0, 0
    // Predicated region
    $region22: #{tpu_custom_call.1} parent=1 // pred_check
      %p47 = pneg %p46
    $region23: #{tpu_custom_call.1} parent=1 // pred_check_branch
      %49 = sbr.rel (%p47) target = $region25
    $region24: #{tpu_custom_call.1} parent=1 // pred_region
      %vm50 = vcmask 523264
      %51 = vst.msk [vmem:[#allocation2] sm:$0xff] %vm50, 0.0
    $region25: #{tpu_custom_call.1} parent=1 // pred_fallthru
      _
    %v52 = vld [vmem:[#allocation2] sm:$0xff]
    %v53 = vld [vmem:[#allocation3] sm:$0xff]
    %v54 = vld [vmem:[#allocation6] sm:$0xff]
    %v55 = vld [vmem:[#allocation6 + $0x8] sm:$0xff]
    %v56 = vld [vmem:[#allocation6 + $0x10] sm:$0xff]
    %v57 = vld [vmem:[#allocation6 + $0x18] sm:$0xff]
    %vm58 = vcmask 261120
    %v60 = vsel %vm58, %v53, 0
    %62 = vmatprep.subr.mxu0 0.0
    %63 = vmatpush1.msra.mxu0 0.0
    %64 = vmatprep.subr.mxu0 0.0
    %65 = vmatpush1.msra.mxu0 0.0
    %66 = vmatprep.subr.mxu0 0.0
    %67 = vmatpush1.msra.mxu0 0.0
    %68 = vmatprep.subr.mxu0 0.0
    %69 = vmatpush1.msra.mxu0 0.0
    %70 = vmatprep.subr.mxu0 0.0
    %71 = vmatpush1.msra.mxu0 0.0
    %72 = vmatprep.subr.mxu0 0.0
    %73 = vmatpush1.msra.mxu0 0.0
    %74 = vmatprep.subr.mxu0 0.0
    %75 = vmatpush1.msra.mxu0 0.0
    %76 = vmatprep.subr.mxu0 0.0
    %77 = vmatpush1.msra.mxu0 0.0
    %78 = vmatprep.subr.mxu0 0.0
    %79 = vmatpush1.msra.mxu0 0.0
    %80 = vmatprep.subr.mxu0 0.0
    %81 = vmatpush1.msra.mxu0 0.0
    %82 = vmatprep.subr.mxu0 0.0
    %83 = vmatpush1.msra.mxu0 0.0
    %84 = vmatprep.subr.mxu0 0.0
    %85 = vmatpush1.msra.mxu0 0.0
    %86 = vmatprep.subr.mxu0 0.0
    %87 = vmatpush1.msra.mxu0 %v57
    %88 = vmatprep.subr.mxu0 0.0
    %89 = vmatpush1.msra.mxu0 %v56
    %90 = vmatprep.subr.mxu0 0.0
    %91 = vmatpush1.msra.mxu0 %v55
    %92 = vmatprep.subr.mxu0 0.0
    %93 = vmatpush1.msra.mxu0 %v54
    %94 = vmatprep.subr.mxu0 0.0
    %95 = vmatpush2.msra.mxu0 0.0
    %96 = vmatprep.subr.mxu0 0.0
    %97 = vmatpush2.msra.mxu0 0.0
    %98 = vmatprep.subr.mxu0 0.0
    %99 = vmatpush2.msra.mxu0 0.0
    %100 = vmatprep.subr.mxu0 0.0
    %101 = vmatpush2.msra.mxu0 0.0
    %102 = vmatprep.subr.mxu0 0.0
    %103 = vmatpush2.msra.mxu0 0.0
    %104 = vmatprep.subr.mxu0 0.0
    %105 = vmatpush2.msra.mxu0 0.0
    %106 = vmatprep.subr.mxu0 0.0
    %107 = vmatpush2.msra.mxu0 0.0
    %108 = vmatprep.subr.mxu0 0.0
    %109 = vmatpush2.msra.mxu0 0.0
    %110 = vmatprep.subr.mxu0 0.0
    %111 = vmatpush2.msra.mxu0 0.0
    %112 = vmatprep.subr.mxu0 0.0
    %113 = vmatpush2.msra.mxu0 0.0
    %114 = vmatprep.subr.mxu0 0.0
    %115 = vmatpush2.msra.mxu0 0.0
    %116 = vmatprep.subr.mxu0 0.0
    %117 = vmatpush2.msra.mxu0 0.0
    %118 = vmatprep.subr.mxu0 0.0
    %119 = vmatpush2.msra.mxu0 0.0
    %120 = vmatprep.subr.mxu0 0.0
    %121 = vmatpush2.msra.mxu0 0.0
    %122 = vmatprep.subr.mxu0 0.0
    %123 = vmatpush2.msra.mxu0 0.0
    %124 = vmatprep.subr.mxu0 0.0
    %125 = vmatpush2.msra.mxu0 0.0
    %126 = vmatprep.mubr.f32.mxu0 0.0
    %127 = vmatmul.mubr.f32.gmra.mxu0 %v60
    %v128 = vpop.f32.mrf.mxu0
    %v129 = vadd.f32 0.0, %v128
    %v130 = vpop.f32.mrf.mxu0
    %131 = vdwg.mxu0
    %v132 = vadd.f32 %v52, %v129
    %vm133 = vcmask 523264
    %134 = vst.msk [vmem:[#allocation2] sm:$0xff] %vm133, %v132
    // Predicated region
    $region26: #{tpu_custom_call.1} parent=1 // pred_check
      %p135 = pneg %p46
    $region27: #{tpu_custom_call.1} parent=1 // pred_check_branch
      %137 = sbr.rel (%p135) target = $region29
    $region28: #{tpu_custom_call.1} parent=1 // pred_region
      %v138 = vld [vmem:[#allocation2] sm:$0xff]
      %v139 = vld [vmem:[%s2] sm:$0x1]
      %v141 = vlaneseq
      %v142 = vshrl.u32 %v141, 7
      %v143 = vsub.s32 0, %v142
      %v144 = vrot.slane %v139, %v143
      %v146 = vadd.f32 %v138, %v144
      %147 = vst.msk [vmem:[#allocation8] sm:$0xff] %vm133, %v146
    $region29: #{tpu_custom_call.1} parent=1 // pred_fallthru
      _
    // Predicated region
    $region30: #{tpu_custom_call.1} parent=1 // pred_check
      _
    $region31: #{tpu_custom_call.1} parent=1 // pred_check_branch
      %149 = sbr.rel (0) target = $region33
    $region32: #{tpu_custom_call.1} parent=1 // pred_region
      %s150 = sadd.s32 0, 0
      %s152 = ssub.s32 128, 128
      %153 = vsyncadd [#allocation5], %s152
      %s154 = smul.addr %s150, 128
      %s155 = scalar_lea.hbm %s3, %s154
      %s157 = sshll.u32 [#allocation8], 4
      %s158 = int_to_ptr.vmem [resolvable:$true] %s157
      %160 = dma.vmem_to_hbm [thread:$0]  %s158, 128, %s155, [#allocation5]
    $region33: #{tpu_custom_call.1} parent=1 // pred_fallthru
      _
    // Predicated region
    $region34: #{tpu_custom_call.1} parent=1 // pred_check
      _
    $region35: #{tpu_custom_call.1} parent=1 // pred_check_branch
      %162 = sbr.rel (0) target = $region37
    $region36: #{tpu_custom_call.1} parent=1 // pred_region
      %163 = dma.done [#allocation5], 128
    $region37: #{tpu_custom_call.1} parent=1 // pred_fallthru
      _
    %164 = vsyncpa [#allocation4], 1
    %165 = vsyncpa [#allocation7], 1
    %166 = vsyncpa [#allocation5], 1

</llo_original>
